<compile_context>
chip_gen: v7x
topology: tpu7x:2x2x1
jax: 0.10.0
libtpu: 0.0.40
codegen_flags: <defaults>
</compile_context>

<pallas_src>
import jax
import jax.numpy as jnp
from jax.experimental import pallas as pl
from jax.experimental.pallas import tpu as pltpu


def encoder_kernel(x_ref, w1_ref, w2_ref, w3_ref, w4_ref, w5_ref, w6_ref,
                   gamma_ref, beta_ref, o_ref):
    """One (TB, seq_inp) batch tile: 6 matmuls + activations + residual + LayerNorm."""
    f32 = jnp.float32
    x = x_ref[...].astype(f32)

    # ---- linear_layers_1 : Tanh -> L1 -> ReLU -> L2 -> ReLU -> L3 ----
    h = jnp.tanh(x)
    h = jnp.maximum(jnp.dot(h, w1_ref[...], preferred_element_type=f32), 0.0)
    h = jnp.maximum(jnp.dot(h, w2_ref[...], preferred_element_type=f32), 0.0)
    lineared_1 = jnp.dot(h, w3_ref[...], preferred_element_type=f32)      # (TB, seq_oup)

    # ---- linear_layers_2 : Tanh -> L4 -> ReLU -> L5 -> ReLU -> L6 ----
    g = jnp.tanh(lineared_1)
    g = jnp.maximum(jnp.dot(g, w4_ref[...], preferred_element_type=f32), 0.0)
    g = jnp.maximum(jnp.dot(g, w5_ref[...], preferred_element_type=f32), 0.0)
    lineared_2 = jnp.dot(g, w6_ref[...], preferred_element_type=f32)      # (TB, seq_oup)

    # ---- residual add + LayerNorm over the full (unpadded) feature axis ----
    s = lineared_1 + lineared_2
    inv_n = 1.0 / s.shape[-1]
    mean = jnp.sum(s, axis=-1, keepdims=True) * inv_n
    centered = s - mean
    var = jnp.sum(centered * centered, axis=-1, keepdims=True) * inv_n    # biased var (torch LN)
    inv = jax.lax.rsqrt(var + 1e-6)
    o_ref[...] = (centered * inv * gamma_ref[...] + beta_ref[...]).astype(o_ref.dtype)


def _round_up(n, m):
    return (n + m - 1) // m * m


def _choose_batch_tile(b):
    # Aim for >= ~4 grid steps (v7x megacore needs >= 2; pipeline steady state wants more),
    # keep the tile a multiple of 8 sublanes, and cap at 256 rows (512 keeps lineared_1
    # live across the whole second branch -> guaranteed vreg spill traffic).
    target = _round_up(-(-max(b, 1) // 4), 8)
    return max(8, min(256, target))


def encoder_forward(x, w1, w2, w3, w4, w5, w6, gamma, beta, *, batch_tile=None):
    """x: (B, seq_inp); weights pre-transposed to (in, out). Returns (B, seq_oup) f32."""
    B, seq_inp = x.shape
    seq_mid = w1.shape[1]
    seq_oup = w3.shape[1]

    TB = _choose_batch_tile(B) if batch_tile is None else max(8, _round_up(batch_tile, 8))
    grid = (pl.cdiv(B, TB),)

    f32 = jnp.float32
    w1c, w2c, w3c, w4c, w5c, w6c = (w.astype(f32) for w in (w1, w2, w3, w4, w5, w6))
    gamma2 = gamma.astype(f32).reshape(1, seq_oup)
    beta2 = beta.astype(f32).reshape(1, seq_oup)

    flops = 2 * B * (seq_inp * seq_mid + 2 * seq_mid * seq_mid
                     + 2 * seq_mid * seq_oup + seq_oup * seq_mid)
    transcendentals = B * (seq_inp + seq_oup + 1)               # two tanh blocks + rsqrt
    bytes_accessed = (x.size * x.dtype.itemsize
                      + sum(w.size * 4 for w in (w1c, w2c, w3c, w4c, w5c, w6c))
                      + gamma2.size * 4 + beta2.size * 4
                      + B * seq_oup * 4)

    const = lambda shape: pl.BlockSpec(shape, lambda i: (0, 0))   # VMEM-resident across grid
    out = pl.pallas_call(
        encoder_kernel,
        out_shape=jax.ShapeDtypeStruct((B, seq_oup), jnp.float32),
        grid=grid,
        in_specs=[
            pl.BlockSpec((TB, seq_inp), lambda i: (i, 0)),        # x: streamed per batch tile
            const(w1c.shape), const(w2c.shape), const(w3c.shape),
            const(w4c.shape), const(w5c.shape), const(w6c.shape),
            const(gamma2.shape), const(beta2.shape),
        ],
        out_specs=pl.BlockSpec((TB, seq_oup), lambda i: (i, 0)),
        compiler_params=pltpu.CompilerParams(dimension_semantics=("parallel",)),
        cost_estimate=pl.CostEstimate(flops=flops, transcendentals=transcendentals,
                                      bytes_accessed=bytes_accessed),
    )(x, w1c, w2c, w3c, w4c, w5c, w6c, gamma2, beta2)

    return out


def encoder_reference(x, w1, w2, w3, w4, w5, w6, gamma, beta):
    """Pure-JAX f32 reference mirroring the PyTorch module semantics."""
    f32 = jnp.float32
    dot = lambda a, w: jnp.dot(a, w, preferred_element_type=f32)
    h = jnp.tanh(x.astype(f32))
    h = jnp.maximum(dot(h, w1), 0.0)
    h = jnp.maximum(dot(h, w2), 0.0)
    l1 = dot(h, w3)
    g = jnp.tanh(l1)
    g = jnp.maximum(dot(g, w4), 0.0)
    g = jnp.maximum(dot(g, w5), 0.0)
    l2 = dot(g, w6)
    s = l1 + l2
    mean = jnp.mean(s, axis=-1, keepdims=True)
    var = jnp.mean((s - mean) ** 2, axis=-1, keepdims=True)
    return (s - mean) * jax.lax.rsqrt(var + 1e-6) * gamma + beta


if __name__ == "__main__":
    batch = 50                       # not a multiple of the tile -> exercises the masked tail tile
    seq_inp, seq_mid, seq_oup = 32, 64, 32

    key = jax.random.PRNGKey(0)
    keys = jax.random.split(key, 8)
    x = jax.random.normal(keys[0], (batch, seq_inp), dtype=jnp.float32)

    def init_linear(k, fan_in, fan_out):
        # nn.Linear default init U(-1/sqrt(fan_in), +1/sqrt(fan_in)); stored transposed (in, out).
        bound = 1.0 / (fan_in ** 0.5)
        return jax.random.uniform(k, (fan_in, fan_out), jnp.float32, -bound, bound)

    w1 = init_linear(keys[1], seq_inp, seq_mid)
    w2 = init_linear(keys[2], seq_mid, seq_mid)
    w3 = init_linear(keys[3], seq_mid, seq_oup)
    w4 = init_linear(keys[4], seq_oup, seq_mid)
    w5 = init_linear(keys[5], seq_mid, seq_mid)
    w6 = init_linear(keys[6], seq_mid, seq_oup)
    gamma = jnp.ones((seq_oup,), jnp.float32)   # LayerNorm default affine params
    beta = jnp.zeros((seq_oup,), jnp.float32)

    fwd = jax.jit(encoder_forward)
    out = jax.block_until_ready(fwd(x, w1, w2, w3, w4, w5, w6, gamma, beta))
    assert out.shape == (batch, seq_oup)
    assert bool(jnp.all(jnp.isfinite(out))), "non-finite values in kernel output"

    ref = encoder_reference(x, w1, w2, w3, w4, w5, w6, gamma, beta)
    assert jnp.allclose(out, ref, atol=2e-2, rtol=2e-2), "mismatch vs f32 reference"

    print("KERNEL_OK")
</pallas_src>

<mosaic_0001>
module attributes {stable_mosaic.version = 11 : i64} {
  func.func @encoder_kernel(%arg0: i32, %arg1: memref<16x32xf32, #tpu.memory_space<vmem>>, %arg2: memref<32x64xf32, #tpu.memory_space<vmem>>, %arg3: memref<64x64xf32, #tpu.memory_space<vmem>>, %arg4: memref<64x32xf32, #tpu.memory_space<vmem>>, %arg5: memref<32x64xf32, #tpu.memory_space<vmem>>, %arg6: memref<64x64xf32, #tpu.memory_space<vmem>>, %arg7: memref<64x32xf32, #tpu.memory_space<vmem>>, %arg8: memref<1x32xf32, #tpu.memory_space<vmem>>, %arg9: memref<1x32xf32, #tpu.memory_space<vmem>>, %arg10: memref<16x32xf32, #tpu.memory_space<vmem>>) attributes {dimension_semantics = [#tpu.dimension_semantics<parallel>], iteration_bounds = array<i64: 4>, scalar_prefetch = 0 : i64, scratch_operands = 0 : i64, tpu.core_type = #tpu.core_type<tc>, window_params = [{transform_indices = @transform_0, window_bounds = array<i64: 16, 32>}, {pipeline_mode = #tpu.pipeline_mode<synchronous>, transform_indices = @transform_1, window_bounds = array<i64: 32, 64>}, {pipeline_mode = #tpu.pipeline_mode<synchronous>, transform_indices = @transform_2, window_bounds = array<i64: 64, 64>}, {pipeline_mode = #tpu.pipeline_mode<synchronous>, transform_indices = @transform_3, window_bounds = array<i64: 64, 32>}, {pipeline_mode = #tpu.pipeline_mode<synchronous>, transform_indices = @transform_4, window_bounds = array<i64: 32, 64>}, {pipeline_mode = #tpu.pipeline_mode<synchronous>, transform_indices = @transform_5, window_bounds = array<i64: 64, 64>}, {pipeline_mode = #tpu.pipeline_mode<synchronous>, transform_indices = @transform_6, window_bounds = array<i64: 64, 32>}, {pipeline_mode = #tpu.pipeline_mode<synchronous>, transform_indices = @transform_7, window_bounds = array<i64: 1, 32>}, {pipeline_mode = #tpu.pipeline_mode<synchronous>, transform_indices = @transform_8, window_bounds = array<i64: 1, 32>}, {transform_indices = @transform_9, window_bounds = array<i64: 16, 32>}]} {
    %c0 = arith.constant 0 : index
    %c0_0 = arith.constant 0 : index
    %0 = vector.load %arg1[%c0, %c0_0] : memref<16x32xf32, #tpu.memory_space<vmem>>, vector<16x32xf32>
    %1 = math.tanh %0 : vector<16x32xf32>
    %c0_1 = arith.constant 0 : index
    %c0_2 = arith.constant 0 : index
    %2 = vector.load %arg2[%c0_1, %c0_2] : memref<32x64xf32, #tpu.memory_space<vmem>>, vector<32x64xf32>
    %cst = arith.constant dense<0.000000e+00> : vector<16x64xf32>
    %3 = tpu.matmul %1, %2, %cst {dimension_numbers = #tpu.dot_dimension_numbers<[1], [0], [0], [1], [0, 0, 1, 1], [], []>} : vector<16x32xf32>, vector<32x64xf32>, vector<16x64xf32> -> vector<16x64xf32>
    %cst_3 = arith.constant 0.000000e+00 : f32
    %4 = vector.broadcast %cst_3 : f32 to vector<16x64xf32>
    %5 = arith.maximumf %3, %4 : vector<16x64xf32>
    %c0_4 = arith.constant 0 : index
    %c0_5 = arith.constant 0 : index
    %6 = vector.load %arg3[%c0_4, %c0_5] : memref<64x64xf32, #tpu.memory_space<vmem>>, vector<64x64xf32>
    %cst_6 = arith.constant dense<0.000000e+00> : vector<16x64xf32>
    %7 = tpu.matmul %5, %6, %cst_6 {dimension_numbers = #tpu.dot_dimension_numbers<[1], [0], [0], [1], [0, 0, 1, 1], [], []>} : vector<16x64xf32>, vector<64x64xf32>, vector<16x64xf32> -> vector<16x64xf32>
    %cst_7 = arith.constant 0.000000e+00 : f32
    %8 = vector.broadcast %cst_7 : f32 to vector<16x64xf32>
    %9 = arith.maximumf %7, %8 : vector<16x64xf32>
    %c0_8 = arith.constant 0 : index
    %c0_9 = arith.constant 0 : index
    %10 = vector.load %arg4[%c0_8, %c0_9] : memref<64x32xf32, #tpu.memory_space<vmem>>, vector<64x32xf32>
    %cst_10 = arith.constant dense<0.000000e+00> : vector<16x32xf32>
    %11 = tpu.matmul %9, %10, %cst_10 {dimension_numbers = #tpu.dot_dimension_numbers<[1], [0], [0], [1], [0, 0, 1, 1], [], []>} : vector<16x64xf32>, vector<64x32xf32>, vector<16x32xf32> -> vector<16x32xf32>
    %12 = math.tanh %11 : vector<16x32xf32>
    %c0_11 = arith.constant 0 : index
    %c0_12 = arith.constant 0 : index
    %13 = vector.load %arg5[%c0_11, %c0_12] : memref<32x64xf32, #tpu.memory_space<vmem>>, vector<32x64xf32>
    %cst_13 = arith.constant dense<0.000000e+00> : vector<16x64xf32>
    %14 = tpu.matmul %12, %13, %cst_13 {dimension_numbers = #tpu.dot_dimension_numbers<[1], [0], [0], [1], [0, 0, 1, 1], [], []>} : vector<16x32xf32>, vector<32x64xf32>, vector<16x64xf32> -> vector<16x64xf32>
    %cst_14 = arith.constant 0.000000e+00 : f32
    %15 = vector.broadcast %cst_14 : f32 to vector<16x64xf32>
    %16 = arith.maximumf %14, %15 : vector<16x64xf32>
    %c0_15 = arith.constant 0 : index
    %c0_16 = arith.constant 0 : index
    %17 = vector.load %arg6[%c0_15, %c0_16] : memref<64x64xf32, #tpu.memory_space<vmem>>, vector<64x64xf32>
    %cst_17 = arith.constant dense<0.000000e+00> : vector<16x64xf32>
    %18 = tpu.matmul %16, %17, %cst_17 {dimension_numbers = #tpu.dot_dimension_numbers<[1], [0], [0], [1], [0, 0, 1, 1], [], []>} : vector<16x64xf32>, vector<64x64xf32>, vector<16x64xf32> -> vector<16x64xf32>
    %cst_18 = arith.constant 0.000000e+00 : f32
    %19 = vector.broadcast %cst_18 : f32 to vector<16x64xf32>
    %20 = arith.maximumf %18, %19 : vector<16x64xf32>
    %c0_19 = arith.constant 0 : index
    %c0_20 = arith.constant 0 : index
    %21 = vector.load %arg7[%c0_19, %c0_20] : memref<64x32xf32, #tpu.memory_space<vmem>>, vector<64x32xf32>
    %cst_21 = arith.constant dense<0.000000e+00> : vector<16x32xf32>
    %22 = tpu.matmul %20, %21, %cst_21 {dimension_numbers = #tpu.dot_dimension_numbers<[1], [0], [0], [1], [0, 0, 1, 1], [], []>} : vector<16x64xf32>, vector<64x32xf32>, vector<16x32xf32> -> vector<16x32xf32>
    %23 = arith.addf %11, %22 : vector<16x32xf32>
    %cst_22 = arith.constant dense<0.000000e+00> : vector<16xf32>
    %24 = vector.multi_reduction <add>, %23, %cst_22 [1] : vector<16x32xf32> to vector<16xf32>
    %25 = vector.shape_cast %24 : vector<16xf32> to vector<16x1xf32>
    %cst_23 = arith.constant 3.125000e-02 : f32
    %26 = vector.broadcast %cst_23 : f32 to vector<16x1xf32>
    %27 = arith.mulf %25, %26 : vector<16x1xf32>
    %28 = vector.broadcast %27 : vector<16x1xf32> to vector<16x32xf32>
    %29 = arith.subf %23, %28 : vector<16x32xf32>
    %30 = arith.mulf %29, %29 : vector<16x32xf32>
    %cst_24 = arith.constant dense<0.000000e+00> : vector<16xf32>
    %31 = vector.multi_reduction <add>, %30, %cst_24 [1] : vector<16x32xf32> to vector<16xf32>
    %32 = vector.shape_cast %31 : vector<16xf32> to vector<16x1xf32>
    %cst_25 = arith.constant 3.125000e-02 : f32
    %33 = vector.broadcast %cst_25 : f32 to vector<16x1xf32>
    %34 = arith.mulf %32, %33 : vector<16x1xf32>
    %cst_26 = arith.constant 9.99999997E-7 : f32
    %35 = vector.broadcast %cst_26 : f32 to vector<16x1xf32>
    %36 = arith.addf %34, %35 : vector<16x1xf32>
    %37 = math.rsqrt %36 : vector<16x1xf32>
    %38 = vector.broadcast %37 : vector<16x1xf32> to vector<16x32xf32>
    %39 = arith.mulf %29, %38 : vector<16x32xf32>
    %c0_27 = arith.constant 0 : index
    %c0_28 = arith.constant 0 : index
    %40 = vector.load %arg8[%c0_27, %c0_28] : memref<1x32xf32, #tpu.memory_space<vmem>>, vector<1x32xf32>
    %41 = vector.broadcast %40 : vector<1x32xf32> to vector<16x32xf32>
    %42 = arith.mulf %39, %41 : vector<16x32xf32>
    %c0_29 = arith.constant 0 : index
    %c0_30 = arith.constant 0 : index
    %43 = vector.load %arg9[%c0_29, %c0_30] : memref<1x32xf32, #tpu.memory_space<vmem>>, vector<1x32xf32>
    %44 = vector.broadcast %43 : vector<1x32xf32> to vector<16x32xf32>
    %45 = arith.addf %42, %44 : vector<16x32xf32>
    %c0_31 = arith.constant 0 : index
    %c0_32 = arith.constant 0 : index
    %46 = vector.load %arg10[%c0_31, %c0_32] : memref<16x32xf32, #tpu.memory_space<vmem>>, vector<16x32xf32>
    tpu.vector_store %arg10[%c0_31, %c0_32], %45 {strides = array<i32>} : memref<16x32xf32, #tpu.memory_space<vmem>>, vector<16x32xf32>,
    return
  }
  func.func @transform_0(%arg0: i32) -> (i32, i32) {
    %c0_i32 = arith.constant 0 : i32
    %c0_i32_0 = arith.constant 0 : i32
    return %arg0, %c0_i32 : i32, i32
  }
  func.func @transform_1(%arg0: i32) -> (i32, i32) {
    %c0_i32 = arith.constant 0 : i32
    %c0_i32_0 = arith.constant 0 : i32
    %c0_i32_1 = arith.constant 0 : i32
    return %c0_i32, %c0_i32_0 : i32, i32
  }
  func.func @transform_2(%arg0: i32) -> (i32, i32) {
    %c0_i32 = arith.constant 0 : i32
    %c0_i32_0 = arith.constant 0 : i32
    %c0_i32_1 = arith.constant 0 : i32
    return %c0_i32, %c0_i32_0 : i32, i32
  }
  func.func @transform_3(%arg0: i32) -> (i32, i32) {
    %c0_i32 = arith.constant 0 : i32
    %c0_i32_0 = arith.constant 0 : i32
    %c0_i32_1 = arith.constant 0 : i32
    return %c0_i32, %c0_i32_0 : i32, i32
  }
  func.func @transform_4(%arg0: i32) -> (i32, i32) {
    %c0_i32 = arith.constant 0 : i32
    %c0_i32_0 = arith.constant 0 : i32
    %c0_i32_1 = arith.constant 0 : i32
    return %c0_i32, %c0_i32_0 : i32, i32
  }
  func.func @transform_5(%arg0: i32) -> (i32, i32) {
    %c0_i32 = arith.constant 0 : i32
    %c0_i32_0 = arith.constant 0 : i32
    %c0_i32_1 = arith.constant 0 : i32
    return %c0_i32, %c0_i32_0 : i32, i32
  }
  func.func @transform_6(%arg0: i32) -> (i32, i32) {
    %c0_i32 = arith.constant 0 : i32
    %c0_i32_0 = arith.constant 0 : i32
    %c0_i32_1 = arith.constant 0 : i32
    return %c0_i32, %c0_i32_0 : i32, i32
  }
  func.func @transform_7(%arg0: i32) -> (i32, i32) {
    %c0_i32 = arith.constant 0 : i32
    %c0_i32_0 = arith.constant 0 : i32
    %c0_i32_1 = arith.constant 0 : i32
    return %c0_i32, %c0_i32_0 : i32, i32
  }
  func.func @transform_8(%arg0: i32) -> (i32, i32) {
    %c0_i32 = arith.constant 0 : i32
    %c0_i32_0 = arith.constant 0 : i32
    %c0_i32_1 = arith.constant 0 : i32
    return %c0_i32, %c0_i32_0 : i32, i32
  }
  func.func @transform_9(%arg0: i32) -> (i32, i32) {
    %c0_i32 = arith.constant 0 : i32
    %c0_i32_0 = arith.constant 0 : i32
    return %arg0, %c0_i32 : i32, i32
  }
}

</mosaic_0001>

<llo_original>
// kernel: encoder_forward.1
$region0: #{encoder_forward.1}
  #allocation0 [shape = 'u32[]', space=smem, size = 0x4, offset = 0x4, fixed_abs, tag = 'smem constant byte address 0x4 - core index']
  #allocation1 [shape = 'u32[144,128]{1,0:T(1,128)}', space=vmem, size = 0x12000, scoped, tag = 'internal scratch']
  %s0 = inlined_call_operand.vmem [shape: f32[50,32], index: 0, kind: input, shape index: {}]
  %s1 = inlined_call_operand.vmem [shape: f32[32,64], index: 1, kind: input, shape index: {}]
  %s2 = inlined_call_operand.vmem [shape: f32[64,64], index: 2, kind: input, shape index: {}]
  %s3 = inlined_call_operand.vmem [shape: f32[64,32], index: 3, kind: input, shape index: {}]
  %s4 = inlined_call_operand.vmem [shape: f32[32,64], index: 4, kind: input, shape index: {}]
  %s5 = inlined_call_operand.vmem [shape: f32[64,64], index: 5, kind: input, shape index: {}]
  %s6 = inlined_call_operand.vmem [shape: f32[64,32], index: 6, kind: input, shape index: {}]
  %s7 = inlined_call_operand.vmem [shape: f32[1,32], index: 7, kind: input, shape index: {}]
  %s8 = inlined_call_operand.vmem [shape: f32[1,32], index: 8, kind: input, shape index: {}]
  %s9 = inlined_call_operand.vmem [shape: f32[50,32], index: 9, kind: output, shape index: {}]
  %s10 = sld [smem:[#allocation0]]
  $region117: #{encoder_forward.1} parent=0
    _
  %s12 = ssub.s32 1, %s10
  %s13 = scalar_select 0, %s12, %s10
  $region1: #{encoder_forward.1} parent=0
    #allocation2 [shape = 'u8[16384]{0}', space=vmem, size = 0x4000, scoped, tag = 'output window, operand 0']
    loop: start=0, step=1, limit=6
    $region2: #{encoder_forward.1} parent=1 // loop_pre_header
      _
    $region3: #{encoder_forward.1} parent=1 // loop_header
      %s15 = sphi 0, %s19
      %p16 = scmp.ge.s32.totalorder %s15, 6
      %s25 = sphi 0, %s27
      %s28 = sphi 0, %s25
      %s29 = sphi 0, %s28
      %s45 = sphi 0, %s29
      %s49 = sphi 0, %s49
      %s51 = sphi 0, %s49
      %s52 = sphi 0, %s51
      %s66 = sphi 0, %s52
      %s70 = sphi 0, %s70
      %s72 = sphi 0, %s70
      %s73 = sphi 0, %s72
      %s87 = sphi 0, %s73
      %s91 = sphi 0, %s91
      %s93 = sphi 0, %s91
      %s94 = sphi 0, %s93
      %s108 = sphi 0, %s94
      %s112 = sphi 0, %s112
      %s114 = sphi 0, %s112
      %s115 = sphi 0, %s114
      %s129 = sphi 0, %s115
      %s133 = sphi 0, %s133
      %s135 = sphi 0, %s133
      %s136 = sphi 0, %s135
      %s150 = sphi 0, %s136
      %s154 = sphi 0, %s154
      %s156 = sphi 0, %s154
      %s157 = sphi 0, %s156
      %s171 = sphi 0, %s157
      %s175 = sphi 0, %s175
      %s177 = sphi 0, %s175
      %s178 = sphi 0, %s177
      %s192 = sphi 0, %s178
      %s196 = sphi 0, %s196
      %s198 = sphi 0, %s196
      %s199 = sphi 0, %s198
      %s213 = sphi 0, %s199
      %s219 = sphi 0, %s221
      %s222 = sphi 0, %s219
      %s223 = sphi 0, %s222
      %s239 = sphi 0, %s223
    $region4: #{encoder_forward.1} parent=1 // loop_header_branch
      %18 = sbr.rel (%p16) target = $region8
    $region5: #{encoder_forward.1} parent=1 // loop_body
      %s20 = ssub.s32 %s15, 1
      %s21 = ssub.s32 %s15, 2
      %s22 = sadd.s32 %s15, 1
      %s23 = ssub.s32 %s15, %s22
      %p24 = scmp.eq.s32.totalorder %s23, 0
      %s26 = sadd.s32 %s25, 1
      %s27 = scalar_select %p24, %s25, %s26
      %p30 = pneg %p24
      %p31 = scmp.eq.s32.totalorder %s15, 3
      %p32 = por %p30, %p31
      %p33 = scmp.ne.s32.totalorder %s25, %s28
      %p34 = scmp.eq.s32.totalorder %s15, 0
      %p35 = por %p33, %p34
      %p36 = scmp.ne.s32.totalorder %s25, %s28
      %p37 = scmp.eq.s32.totalorder %s20, 3
      %p38 = por %p36, %p37
      %p39 = scmp.ne.s32.totalorder %s28, %s29
      %p40 = scmp.eq.s32.totalorder %s20, 0
      %p41 = por %p39, %p40
      %p42 = scmp.ne.s32.totalorder %s28, %s29
      %p43 = scmp.eq.s32.totalorder %s21, 3
      %p44 = por %p42, %p43
      %p46 = scmp.ne.s32.totalorder %s29, %s45
      %p47 = scmp.eq.s32.totalorder %s21, 0
      %p48 = por %p46, %p47
      %s50 = sadd.s32 %s49, 1
      %p53 = scmp.eq.s32.totalorder %s15, 3
      %p54 = scmp.ne.s32.totalorder %s49, %s51
      %p55 = scmp.eq.s32.totalorder %s15, 0
      %p56 = por %p54, %p55
      %p57 = scmp.ne.s32.totalorder %s49, %s51
      %p58 = scmp.eq.s32.totalorder %s20, 3
      %p59 = por %p57, %p58
      %p60 = scmp.ne.s32.totalorder %s51, %s52
      %p61 = scmp.eq.s32.totalorder %s20, 0
      %p62 = por %p60, %p61
      %p63 = scmp.ne.s32.totalorder %s51, %s52
      %p64 = scmp.eq.s32.totalorder %s21, 3
      %p65 = por %p63, %p64
      %p67 = scmp.ne.s32.totalorder %s52, %s66
      %p68 = scmp.eq.s32.totalorder %s21, 0
      %p69 = por %p67, %p68
      %s71 = sadd.s32 %s70, 1
      %p74 = scmp.eq.s32.totalorder %s15, 3
      %p75 = scmp.ne.s32.totalorder %s70, %s72
      %p76 = scmp.eq.s32.totalorder %s15, 0
      %p77 = por %p75, %p76
      %p78 = scmp.ne.s32.totalorder %s70, %s72
      %p79 = scmp.eq.s32.totalorder %s20, 3
      %p80 = por %p78, %p79
      %p81 = scmp.ne.s32.totalorder %s72, %s73
      %p82 = scmp.eq.s32.totalorder %s20, 0
      %p83 = por %p81, %p82
      %p84 = scmp.ne.s32.totalorder %s72, %s73
      %p85 = scmp.eq.s32.totalorder %s21, 3
      %p86 = por %p84, %p85
      %p88 = scmp.ne.s32.totalorder %s73, %s87
      %p89 = scmp.eq.s32.totalorder %s21, 0
      %p90 = por %p88, %p89
      %s92 = sadd.s32 %s91, 1
      %p95 = scmp.eq.s32.totalorder %s15, 3
      %p96 = scmp.ne.s32.totalorder %s91, %s93
      %p97 = scmp.eq.s32.totalorder %s15, 0
      %p98 = por %p96, %p97
      %p99 = scmp.ne.s32.totalorder %s91, %s93
      %p100 = scmp.eq.s32.totalorder %s20, 3
      %p101 = por %p99, %p100
      %p102 = scmp.ne.s32.totalorder %s93, %s94
      %p103 = scmp.eq.s32.totalorder %s20, 0
      %p104 = por %p102, %p103
      %p105 = scmp.ne.s32.totalorder %s93, %s94
      %p106 = scmp.eq.s32.totalorder %s21, 3
      %p107 = por %p105, %p106
      %p109 = scmp.ne.s32.totalorder %s94, %s108
      %p110 = scmp.eq.s32.totalorder %s21, 0
      %p111 = por %p109, %p110
      %s113 = sadd.s32 %s112, 1
      %p116 = scmp.eq.s32.totalorder %s15, 3
      %p117 = scmp.ne.s32.totalorder %s112, %s114
      %p118 = scmp.eq.s32.totalorder %s15, 0
      %p119 = por %p117, %p118
      %p120 = scmp.ne.s32.totalorder %s112, %s114
      %p121 = scmp.eq.s32.totalorder %s20, 3
      %p122 = por %p120, %p121
      %p123 = scmp.ne.s32.totalorder %s114, %s115
      %p124 = scmp.eq.s32.totalorder %s20, 0
      %p125 = por %p123, %p124
      %p126 = scmp.ne.s32.totalorder %s114, %s115
      %p127 = scmp.eq.s32.totalorder %s21, 3
      %p128 = por %p126, %p127
      %p130 = scmp.ne.s32.totalorder %s115, %s129
      %p131 = scmp.eq.s32.totalorder %s21, 0
      %p132 = por %p130, %p131
      %s134 = sadd.s32 %s133, 1
      %p137 = scmp.eq.s32.totalorder %s15, 3
      %p138 = scmp.ne.s32.totalorder %s133, %s135
      %p139 = scmp.eq.s32.totalorder %s15, 0
      %p140 = por %p138, %p139
      %p141 = scmp.ne.s32.totalorder %s133, %s135
      %p142 = scmp.eq.s32.totalorder %s20, 3
      %p143 = por %p141, %p142
      %p144 = scmp.ne.s32.totalorder %s135, %s136
      %p145 = scmp.eq.s32.totalorder %s20, 0
      %p146 = por %p144, %p145
      %p147 = scmp.ne.s32.totalorder %s135, %s136
      %p148 = scmp.eq.s32.totalorder %s21, 3
      %p149 = por %p147, %p148
      %p151 = scmp.ne.s32.totalorder %s136, %s150
      %p152 = scmp.eq.s32.totalorder %s21, 0
      %p153 = por %p151, %p152
      %s155 = sadd.s32 %s154, 1
      %p158 = scmp.eq.s32.totalorder %s15, 3
      %p159 = scmp.ne.s32.totalorder %s154, %s156
      %p160 = scmp.eq.s32.totalorder %s15, 0
      %p161 = por %p159, %p160
      %p162 = scmp.ne.s32.totalorder %s154, %s156
      %p163 = scmp.eq.s32.totalorder %s20, 3
      %p164 = por %p162, %p163
      %p165 = scmp.ne.s32.totalorder %s156, %s157
      %p166 = scmp.eq.s32.totalorder %s20, 0
      %p167 = por %p165, %p166
      %p168 = scmp.ne.s32.totalorder %s156, %s157
      %p169 = scmp.eq.s32.totalorder %s21, 3
      %p170 = por %p168, %p169
      %p172 = scmp.ne.s32.totalorder %s157, %s171
      %p173 = scmp.eq.s32.totalorder %s21, 0
      %p174 = por %p172, %p173
      %s176 = sadd.s32 %s175, 1
      %p179 = scmp.eq.s32.totalorder %s15, 3
      %p180 = scmp.ne.s32.totalorder %s175, %s177
      %p181 = scmp.eq.s32.totalorder %s15, 0
      %p182 = por %p180, %p181
      %p183 = scmp.ne.s32.totalorder %s175, %s177
      %p184 = scmp.eq.s32.totalorder %s20, 3
      %p185 = por %p183, %p184
      %p186 = scmp.ne.s32.totalorder %s177, %s178
      %p187 = scmp.eq.s32.totalorder %s20, 0
      %p188 = por %p186, %p187
      %p189 = scmp.ne.s32.totalorder %s177, %s178
      %p190 = scmp.eq.s32.totalorder %s21, 3
      %p191 = por %p189, %p190
      %p193 = scmp.ne.s32.totalorder %s178, %s192
      %p194 = scmp.eq.s32.totalorder %s21, 0
      %p195 = por %p193, %p194
      %s197 = sadd.s32 %s196, 1
      %p200 = scmp.eq.s32.totalorder %s15, 3
      %p201 = scmp.ne.s32.totalorder %s196, %s198
      %p202 = scmp.eq.s32.totalorder %s15, 0
      %p203 = por %p201, %p202
      %p204 = scmp.ne.s32.totalorder %s196, %s198
      %p205 = scmp.eq.s32.totalorder %s20, 3
      %p206 = por %p204, %p205
      %p207 = scmp.ne.s32.totalorder %s198, %s199
      %p208 = scmp.eq.s32.totalorder %s20, 0
      %p209 = por %p207, %p208
      %p210 = scmp.ne.s32.totalorder %s198, %s199
      %p211 = scmp.eq.s32.totalorder %s21, 3
      %p212 = por %p210, %p211
      %p214 = scmp.ne.s32.totalorder %s199, %s213
      %p215 = scmp.eq.s32.totalorder %s21, 0
      %p216 = por %p214, %p215
      %s217 = ssub.s32 %s15, %s22
      %p218 = scmp.eq.s32.totalorder %s217, 0
      %s220 = sadd.s32 %s219, 1
      %s221 = scalar_select %p218, %s219, %s220
      %p224 = pneg %p218
      %p225 = scmp.eq.s32.totalorder %s15, 3
      %p226 = por %p224, %p225
      %p227 = scmp.ne.s32.totalorder %s219, %s222
      %p228 = scmp.eq.s32.totalorder %s15, 0
      %p229 = por %p227, %p228
      %p230 = scmp.ne.s32.totalorder %s219, %s222
      %p231 = scmp.eq.s32.totalorder %s20, 3
      %p232 = por %p230, %p231
      %p233 = scmp.ne.s32.totalorder %s222, %s223
      %p234 = scmp.eq.s32.totalorder %s20, 0
      %p235 = por %p233, %p234
      %p236 = scmp.ne.s32.totalorder %s222, %s223
      %p237 = scmp.eq.s32.totalorder %s21, 3
      %p238 = por %p236, %p237
      %p240 = scmp.ne.s32.totalorder %s223, %s239
      %p241 = scmp.eq.s32.totalorder %s21, 0
      %p242 = por %p240, %p241
      %p243 = scmp.le.s32.totalorder 1, %s15
      %p244 = scmp.lt.s32.totalorder %s15, 5
      %p245 = pnand %p243, %p244
      %p246 = pneg %p245
      // Predicated region
      $region9: #{encoder_forward.1} parent=5 // pred_check
        _
      $region10: #{encoder_forward.1} parent=5 // pred_check_branch
        %248 = sbr.rel (%p245) target = $region12
      $region11: #{encoder_forward.1} parent=5 // pred_region
        %s249 = ssub.s32 %s15, 1
        // Predicated region
        $region13: #{encoder_forward.1} parent=11 // pred_check
          %p250 = pneg %p62
        $region14: #{encoder_forward.1} parent=11 // pred_check_branch
          %252 = sbr.rel (%p250) target = $region16
        $region15: #{encoder_forward.1} parent=11 // pred_region
          _
        $region16: #{encoder_forward.1} parent=11 // pred_fallthru
          _
        // Predicated region
        $region17: #{encoder_forward.1} parent=11 // pred_check
          %p253 = pneg %p83
        $region18: #{encoder_forward.1} parent=11 // pred_check_branch
          %255 = sbr.rel (%p253) target = $region20
        $region19: #{encoder_forward.1} parent=11 // pred_region
          _
        $region20: #{encoder_forward.1} parent=11 // pred_fallthru
          _
        // Predicated region
        $region21: #{encoder_forward.1} parent=11 // pred_check
          %p256 = pneg %p104
        $region22: #{encoder_forward.1} parent=11 // pred_check_branch
          %258 = sbr.rel (%p256) target = $region24
        $region23: #{encoder_forward.1} parent=11 // pred_region
          _
        $region24: #{encoder_forward.1} parent=11 // pred_fallthru
          _
        // Predicated region
        $region25: #{encoder_forward.1} parent=11 // pred_check
          %p259 = pneg %p125
        $region26: #{encoder_forward.1} parent=11 // pred_check_branch
          %261 = sbr.rel (%p259) target = $region28
        $region27: #{encoder_forward.1} parent=11 // pred_region
          _
        $region28: #{encoder_forward.1} parent=11 // pred_fallthru
          _
        // Predicated region
        $region29: #{encoder_forward.1} parent=11 // pred_check
          %p262 = pneg %p146
        $region30: #{encoder_forward.1} parent=11 // pred_check_branch
          %264 = sbr.rel (%p262) target = $region32
        $region31: #{encoder_forward.1} parent=11 // pred_region
          _
        $region32: #{encoder_forward.1} parent=11 // pred_fallthru
          _
        // Predicated region
        $region33: #{encoder_forward.1} parent=11 // pred_check
          %p265 = pneg %p167
        $region34: #{encoder_forward.1} parent=11 // pred_check_branch
          %267 = sbr.rel (%p265) target = $region36
        $region35: #{encoder_forward.1} parent=11 // pred_region
          _
        $region36: #{encoder_forward.1} parent=11 // pred_fallthru
          _
        // Predicated region
        $region37: #{encoder_forward.1} parent=11 // pred_check
          %p268 = pneg %p188
        $region38: #{encoder_forward.1} parent=11 // pred_check_branch
          %270 = sbr.rel (%p268) target = $region40
        $region39: #{encoder_forward.1} parent=11 // pred_region
          _
        $region40: #{encoder_forward.1} parent=11 // pred_fallthru
          _
        // Predicated region
        $region41: #{encoder_forward.1} parent=11 // pred_check
          %p271 = pneg %p209
        $region42: #{encoder_forward.1} parent=11 // pred_check_branch
          %273 = sbr.rel (%p271) target = $region44
        $region43: #{encoder_forward.1} parent=11 // pred_region
          _
        $region44: #{encoder_forward.1} parent=11 // pred_fallthru
          _
      $region12: #{encoder_forward.1} parent=5 // pred_fallthru
        _
      %p274 = scmp.lt.s32.totalorder %s15, 4
      // Predicated region
      $region45: #{encoder_forward.1} parent=5 // pred_check
        %p275 = pneg %p274
      $region46: #{encoder_forward.1} parent=5 // pred_check_branch
        %277 = sbr.rel (%p275) target = $region48
      $region47: #{encoder_forward.1} parent=5 // pred_region
        // Predicated region
        $region49: #{encoder_forward.1} parent=47 // pred_check
          %p278 = pneg %p35
        $region50: #{encoder_forward.1} parent=47 // pred_check_branch
          %280 = sbr.rel (%p278) target = $region52
        $region51: #{encoder_forward.1} parent=47 // pred_region
          %s281 = smul.u32 2, %s15
          %s282 = ssub.s32 7, %s281
          %p283 = scmp.lt.s32.totalorder %s282, 2
          %s284 = scalar_select %p283, %s282, 2
          %s285 = smul.u32 128, %s284
          %p286 = scmp.lt.s32.totalorder %s281, 6
          %s287 = scalar_select %p286, %s281, 6
          %s288 = smul.addr %s287, 8
          %s289 = scalar_lea.vmem %s0, %s288
          %s290 = smul.u32 2, %s15
          %s291 = ssub.s32 7, %s290
          %p292 = scmp.lt.s32.totalorder %s291, 2
          %s293 = scalar_select %p292, %s291, 2
          %s294 = smul.u32 128, %s293
        $region52: #{encoder_forward.1} parent=47 // pred_fallthru
          _
      $region48: #{encoder_forward.1} parent=5 // pred_fallthru
        _
      %p295 = scmp.le.s32.totalorder 1, %s15
      %p296 = scmp.lt.s32.totalorder %s15, 5
      %p297 = pnand %p295, %p296
      %p298 = pneg %p297
      // Predicated region
      $region53: #{encoder_forward.1} parent=5 // pred_check
        _
      $region54: #{encoder_forward.1} parent=5 // pred_check_branch
        %300 = sbr.rel (%p297) target = $region56
      $region55: #{encoder_forward.1} parent=5 // pred_region
        %s301 = ssub.s32 %s15, 1
        %s302 = smul.u32 2, %s20
        %s303 = ssub.s32 7, %s302
        %p304 = scmp.lt.s32.totalorder %s303, 2
        %s305 = scalar_select %p304, %s303, 2
        %s306 = smul.u32 128, %s305
        %p307 = scmp.lt.s32.totalorder %s302, 6
        %s308 = scalar_select %p307, %s302, 6
        %s309 = smul.addr %s308, 8
        %s310 = scalar_lea.vmem %s0, %s309
        %p311 = pneg %p41
        %p312 = pneg %p38
        %p313 = pneg %p62
        %p314 = pneg %p59
        %p315 = pneg %p83
        %p316 = pneg %p80
        %p317 = pneg %p104
        %p318 = pneg %p101
        %p319 = pneg %p125
        %p320 = pneg %p122
        %p321 = pneg %p146
        %p322 = pneg %p143
        %p323 = pneg %p167
        %p324 = pneg %p164
        %p325 = pneg %p188
        %p326 = pneg %p185
        %p327 = pneg %p209
        %p328 = pneg %p206
        %p329 = pneg %p235
        %p330 = pneg %p232
        %s331 = sand.u32 %s222, 1
        %s332 = sand.u32 %s222, 1
        %s333 = smul.addr %s332, 16
        %s334 = scalar_lea.vmem [#allocation2], %s333
        %s335 = smul.u32 2, %s20
        %s336 = ssub.s32 7, %s335
        %p337 = scmp.lt.s32.totalorder %s336, 2
        %s338 = scalar_select %p337, %s336, 2
        %s339 = smul.u32 128, %s338
        %p340 = scmp.lt.s32.totalorder %s335, 6
        %s341 = scalar_select %p340, %s335, 6
        %s342 = smul.addr %s341, 8
        %s343 = scalar_lea.vmem %s0, %s342
        %s344 = smul.u32 2, %s20
        %s345 = ssub.s32 7, %s344
        %p346 = scmp.lt.s32.totalorder %s345, 2
        %s347 = scalar_select %p346, %s345, 2
        %s348 = smul.u32 128, %s347
        %s349 = smul.u32 2, %s20
        %s350 = ssub.s32 7, %s349
        %p351 = scmp.lt.s32.totalorder %s350, 2
        %s352 = scalar_select %p351, %s350, 2
        %s353 = smul.u32 128, %s352
        %v354 = vld [vmem:[%s343] sm:$0xff]
        %v355 = vld [vmem:[%s343 + $0x8] sm:$0xff]
        %v356 = vtanh.pop %v354
        %v357 = vtanh.pop %v355
        %v358 = vld [vmem:[%s1] sm:$0xff]
        %v359 = vld [vmem:[%s1 + $0x8] sm:$0xff]
        %v360 = vld [vmem:[%s1 + $0x10] sm:$0xff]
        %v361 = vld [vmem:[%s1 + $0x18] sm:$0xff]
        %vm362 = vcmask 261120
        %v364 = vsel %vm362, %v356, 0
        %v367 = vsel %vm362, %v357, 0
        %369 = vmatprep.subr.mxu0 0.0
        %370 = vmatpush1.msra.mxu0 %v358
        %371 = vmatprep.subr.mxu0 0.0
        %372 = vmatpush1.msra.mxu0 %v359
        %373 = vmatprep.subr.mxu0 0.0
        %374 = vmatpush1.msra.mxu0 %v360
        %375 = vmatprep.subr.mxu0 0.0
        %376 = vmatpush1.msra.mxu0 %v361
        %377 = vmatprep.subr.mxu0 0.0
        %378 = vmatpush1.msra.mxu0 0.0
        %379 = vmatprep.subr.mxu0 0.0
        %380 = vmatpush1.msra.mxu0 0.0
        %381 = vmatprep.subr.mxu0 0.0
        %382 = vmatpush1.msra.mxu0 0.0
        %383 = vmatprep.subr.mxu0 0.0
        %384 = vmatpush1.msra.mxu0 0.0
        %385 = vmatprep.subr.mxu0 0.0
        %386 = vmatpush1.msra.mxu0 0.0
        %387 = vmatprep.subr.mxu0 0.0
        %388 = vmatpush1.msra.mxu0 0.0
        %389 = vmatprep.subr.mxu0 0.0
        %390 = vmatpush1.msra.mxu0 0.0
        %391 = vmatprep.subr.mxu0 0.0
        %392 = vmatpush1.msra.mxu0 0.0
        %393 = vmatprep.subr.mxu0 0.0
        %394 = vmatpush1.msra.mxu0 0.0
        %395 = vmatprep.subr.mxu0 0.0
        %396 = vmatpush1.msra.mxu0 0.0
        %397 = vmatprep.subr.mxu0 0.0
        %398 = vmatpush1.msra.mxu0 0.0
        %399 = vmatprep.subr.mxu0 0.0
        %400 = vmatpush1.msra.mxu0 0.0
        %401 = vmatprep.subr.mxu0 0.0
        %402 = vmatpush1.msra.mxu0 0.0
        %403 = vmatprep.subr.mxu0 0.0
        %404 = vmatpush1.msra.mxu0 0.0
        %405 = vmatprep.subr.mxu0 0.0
        %406 = vmatpush1.msra.mxu0 0.0
        %407 = vmatprep.subr.mxu0 0.0
        %408 = vmatpush1.msra.mxu0 0.0
        %409 = vmatprep.subr.mxu0 0.0
        %410 = vmatpush1.msra.mxu0 0.0
        %411 = vmatprep.subr.mxu0 0.0
        %412 = vmatpush1.msra.mxu0 0.0
        %413 = vmatprep.subr.mxu0 0.0
        %414 = vmatpush1.msra.mxu0 0.0
        %415 = vmatprep.subr.mxu0 0.0
        %416 = vmatpush1.msra.mxu0 0.0
        %417 = vmatprep.subr.mxu0 0.0
        %418 = vmatpush1.msra.mxu0 0.0
        %419 = vmatprep.subr.mxu0 0.0
        %420 = vmatpush1.msra.mxu0 0.0
        %421 = vmatprep.subr.mxu0 0.0
        %422 = vmatpush1.msra.mxu0 0.0
        %423 = vmatprep.subr.mxu0 0.0
        %424 = vmatpush1.msra.mxu0 0.0
        %425 = vmatprep.subr.mxu0 0.0
        %426 = vmatpush1.msra.mxu0 0.0
        %427 = vmatprep.subr.mxu0 0.0
        %428 = vmatpush1.msra.mxu0 0.0
        %429 = vmatprep.subr.mxu0 0.0
        %430 = vmatpush1.msra.mxu0 0.0
        %431 = vmatprep.subr.mxu0 0.0
        %432 = vmatpush1.msra.mxu0 0.0
        %433 = vmatprep.mubr.f32.mxu0 0.0
        %434 = vmatmul.mubr.f32.gmra.mrb[0].mxu0 %v364
        %v435 = vpop.f32.mrb[0].mxu0
        %v436 = vadd.f32 0.0, %v435
        %v437 = vpop.f32.mrb[0].mxu0
        %438 = vmatprep.mubr.f32.mxu0 0.0
        %439 = vmatmul.mubr.f32.gmra.mrb[0].mxu0 %v367
        %v440 = vpop.f32.mrb[0].mxu0
        %v441 = vadd.f32 0.0, %v440
        %v442 = vpop.f32.mrb[0].mxu0
        %443 = vdwg.mxu0
        %v444 = vmax.f32 %v436, 0.0
        %v445 = vmax.f32 %v441, 0.0
        %v446 = vld [vmem:[%s2] sm:$0xff]
        %v447 = vld [vmem:[%s2 + $0x8] sm:$0xff]
        %v448 = vld [vmem:[%s2 + $0x10] sm:$0xff]
        %v449 = vld [vmem:[%s2 + $0x18] sm:$0xff]
        %v450 = vld [vmem:[%s2 + $0x20] sm:$0xff]
        %v451 = vld [vmem:[%s2 + $0x28] sm:$0xff]
        %v452 = vld [vmem:[%s2 + $0x30] sm:$0xff]
        %v453 = vld [vmem:[%s2 + $0x38] sm:$0xff]
        %vm454 = vcmask 523264
        %v456 = vsel %vm454, %v444, 0
        %v459 = vsel %vm454, %v445, 0
        %461 = vmatprep.subr.mxu0 0.0
        %462 = vmatpush1.msra.mxu0 %v446
        %463 = vmatprep.subr.mxu0 0.0
        %464 = vmatpush1.msra.mxu0 %v447
        %465 = vmatprep.subr.mxu0 0.0
        %466 = vmatpush1.msra.mxu0 %v448
        %467 = vmatprep.subr.mxu0 0.0
        %468 = vmatpush1.msra.mxu0 %v449
        %469 = vmatprep.subr.mxu0 0.0
        %470 = vmatpush1.msra.mxu0 %v450
        %471 = vmatprep.subr.mxu0 0.0
        %472 = vmatpush1.msra.mxu0 %v451
        %473 = vmatprep.subr.mxu0 0.0
        %474 = vmatpush1.msra.mxu0 %v452
        %475 = vmatprep.subr.mxu0 0.0
        %476 = vmatpush1.msra.mxu0 %v453
        %477 = vmatprep.subr.mxu0 0.0
        %478 = vmatpush1.msra.mxu0 0.0
        %479 = vmatprep.subr.mxu0 0.0
        %480 = vmatpush1.msra.mxu0 0.0
        %481 = vmatprep.subr.mxu0 0.0
        %482 = vmatpush1.msra.mxu0 0.0
        %483 = vmatprep.subr.mxu0 0.0
        %484 = vmatpush1.msra.mxu0 0.0
        %485 = vmatprep.subr.mxu0 0.0
        %486 = vmatpush1.msra.mxu0 0.0
        %487 = vmatprep.subr.mxu0 0.0
        %488 = vmatpush1.msra.mxu0 0.0
        %489 = vmatprep.subr.mxu0 0.0
        %490 = vmatpush1.msra.mxu0 0.0
        %491 = vmatprep.subr.mxu0 0.0
        %492 = vmatpush1.msra.mxu0 0.0
        %493 = vmatprep.subr.mxu0 0.0
        %494 = vmatpush1.msra.mxu0 0.0
        %495 = vmatprep.subr.mxu0 0.0
        %496 = vmatpush1.msra.mxu0 0.0
        %497 = vmatprep.subr.mxu0 0.0
        %498 = vmatpush1.msra.mxu0 0.0
        %499 = vmatprep.subr.mxu0 0.0
        %500 = vmatpush1.msra.mxu0 0.0
        %501 = vmatprep.subr.mxu0 0.0
        %502 = vmatpush1.msra.mxu0 0.0
        %503 = vmatprep.subr.mxu0 0.0
        %504 = vmatpush1.msra.mxu0 0.0
        %505 = vmatprep.subr.mxu0 0.0
        %506 = vmatpush1.msra.mxu0 0.0
        %507 = vmatprep.subr.mxu0 0.0
        %508 = vmatpush1.msra.mxu0 0.0
        %509 = vmatprep.subr.mxu0 0.0
        %510 = vmatpush1.msra.mxu0 0.0
        %511 = vmatprep.subr.mxu0 0.0
        %512 = vmatpush1.msra.mxu0 0.0
        %513 = vmatprep.subr.mxu0 0.0
        %514 = vmatpush1.msra.mxu0 0.0
        %515 = vmatprep.subr.mxu0 0.0
        %516 = vmatpush1.msra.mxu0 0.0
        %517 = vmatprep.subr.mxu0 0.0
        %518 = vmatpush1.msra.mxu0 0.0
        %519 = vmatprep.subr.mxu0 0.0
        %520 = vmatpush1.msra.mxu0 0.0
        %521 = vmatprep.subr.mxu0 0.0
        %522 = vmatpush1.msra.mxu0 0.0
        %523 = vmatprep.subr.mxu0 0.0
        %524 = vmatpush1.msra.mxu0 0.0
        %525 = vmatprep.mubr.f32.mxu0 0.0
        %526 = vmatmul.mubr.f32.gmra.mrb[0].mxu0 %v456
        %v527 = vpop.f32.mrb[0].mxu0
        %v528 = vadd.f32 0.0, %v527
        %v529 = vpop.f32.mrb[0].mxu0
        %530 = vmatprep.mubr.f32.mxu0 0.0
        %531 = vmatmul.mubr.f32.gmra.mrb[0].mxu0 %v459
        %v532 = vpop.f32.mrb[0].mxu0
        %v533 = vadd.f32 0.0, %v532
        %v534 = vpop.f32.mrb[0].mxu0
        %535 = vdwg.mxu0
        %v536 = vmax.f32 %v528, 0.0
        %v537 = vmax.f32 %v533, 0.0
        %v538 = vld [vmem:[%s3] sm:$0xff]
        %v539 = vld [vmem:[%s3 + $0x8] sm:$0xff]
        %v540 = vld [vmem:[%s3 + $0x10] sm:$0xff]
        %v541 = vld [vmem:[%s3 + $0x18] sm:$0xff]
        %v542 = vld [vmem:[%s3 + $0x20] sm:$0xff]
        %v543 = vld [vmem:[%s3 + $0x28] sm:$0xff]
        %v544 = vld [vmem:[%s3 + $0x30] sm:$0xff]
        %v545 = vld [vmem:[%s3 + $0x38] sm:$0xff]
        %v547 = vsel %vm454, %v536, 0
        %v550 = vsel %vm454, %v537, 0
        %552 = vmatprep.subr.mxu0 0.0
        %553 = vmatpush1.msra.mxu0 %v538
        %554 = vmatprep.subr.mxu0 0.0
        %555 = vmatpush1.msra.mxu0 %v539
        %556 = vmatprep.subr.mxu0 0.0
        %557 = vmatpush1.msra.mxu0 %v540
        %558 = vmatprep.subr.mxu0 0.0
        %559 = vmatpush1.msra.mxu0 %v541
        %560 = vmatprep.subr.mxu0 0.0
        %561 = vmatpush1.msra.mxu0 %v542
        %562 = vmatprep.subr.mxu0 0.0
        %563 = vmatpush1.msra.mxu0 %v543
        %564 = vmatprep.subr.mxu0 0.0
        %565 = vmatpush1.msra.mxu0 %v544
        %566 = vmatprep.subr.mxu0 0.0
        %567 = vmatpush1.msra.mxu0 %v545
        %568 = vmatprep.subr.mxu0 0.0
        %569 = vmatpush1.msra.mxu0 0.0
        %570 = vmatprep.subr.mxu0 0.0
        %571 = vmatpush1.msra.mxu0 0.0
        %572 = vmatprep.subr.mxu0 0.0
        %573 = vmatpush1.msra.mxu0 0.0
        %574 = vmatprep.subr.mxu0 0.0
        %575 = vmatpush1.msra.mxu0 0.0
        %576 = vmatprep.subr.mxu0 0.0
        %577 = vmatpush1.msra.mxu0 0.0
        %578 = vmatprep.subr.mxu0 0.0
        %579 = vmatpush1.msra.mxu0 0.0
        %580 = vmatprep.subr.mxu0 0.0
        %581 = vmatpush1.msra.mxu0 0.0
        %582 = vmatprep.subr.mxu0 0.0
        %583 = vmatpush1.msra.mxu0 0.0
        %584 = vmatprep.subr.mxu0 0.0
        %585 = vmatpush1.msra.mxu0 0.0
        %586 = vmatprep.subr.mxu0 0.0
        %587 = vmatpush1.msra.mxu0 0.0
        %588 = vmatprep.subr.mxu0 0.0
        %589 = vmatpush1.msra.mxu0 0.0
        %590 = vmatprep.subr.mxu0 0.0
        %591 = vmatpush1.msra.mxu0 0.0
        %592 = vmatprep.subr.mxu0 0.0
        %593 = vmatpush1.msra.mxu0 0.0
        %594 = vmatprep.subr.mxu0 0.0
        %595 = vmatpush1.msra.mxu0 0.0
        %596 = vmatprep.subr.mxu0 0.0
        %597 = vmatpush1.msra.mxu0 0.0
        %598 = vmatprep.subr.mxu0 0.0
        %599 = vmatpush1.msra.mxu0 0.0
        %600 = vmatprep.subr.mxu0 0.0
        %601 = vmatpush1.msra.mxu0 0.0
        %602 = vmatprep.subr.mxu0 0.0
        %603 = vmatpush1.msra.mxu0 0.0
        %604 = vmatprep.subr.mxu0 0.0
        %605 = vmatpush1.msra.mxu0 0.0
        %606 = vmatprep.subr.mxu0 0.0
        %607 = vmatpush1.msra.mxu0 0.0
        %608 = vmatprep.subr.mxu0 0.0
        %609 = vmatpush1.msra.mxu0 0.0
        %610 = vmatprep.subr.mxu0 0.0
        %611 = vmatpush1.msra.mxu0 0.0
        %612 = vmatprep.subr.mxu0 0.0
        %613 = vmatpush1.msra.mxu0 0.0
        %614 = vmatprep.subr.mxu0 0.0
        %615 = vmatpush1.msra.mxu0 0.0
        %616 = vmatprep.mubr.f32.mxu0 0.0
        %617 = vmatmul.mubr.f32.gmra.mrb[0].mxu0 %v547
        %v618 = vpop.f32.mrb[0].mxu0
        %v619 = vadd.f32 0.0, %v618
        %v620 = vpop.f32.mrb[0].mxu0
        %621 = vmatprep.mubr.f32.mxu0 0.0
        %622 = vmatmul.mubr.f32.gmra.mrb[0].mxu0 %v550
        %v623 = vpop.f32.mrb[0].mxu0
        %v624 = vadd.f32 0.0, %v623
        %v625 = vpop.f32.mrb[0].mxu0
        %626 = vdwg.mxu0
        %v627 = vtanh.pop %v619
        %v628 = vtanh.pop %v624
        %v629 = vld [vmem:[%s4] sm:$0xff]
        %v630 = vld [vmem:[%s4 + $0x8] sm:$0xff]
        %v631 = vld [vmem:[%s4 + $0x10] sm:$0xff]
        %v632 = vld [vmem:[%s4 + $0x18] sm:$0xff]
        %v634 = vsel %vm362, %v627, 0
        %v637 = vsel %vm362, %v628, 0
        %639 = vmatprep.subr.mxu0 0.0
        %640 = vmatpush1.msra.mxu0 %v629
        %641 = vmatprep.subr.mxu0 0.0
        %642 = vmatpush1.msra.mxu0 %v630
        %643 = vmatprep.subr.mxu0 0.0
        %644 = vmatpush1.msra.mxu0 %v631
        %645 = vmatprep.subr.mxu0 0.0
        %646 = vmatpush1.msra.mxu0 %v632
        %647 = vmatprep.subr.mxu0 0.0
        %648 = vmatpush1.msra.mxu0 0.0
        %649 = vmatprep.subr.mxu0 0.0
        %650 = vmatpush1.msra.mxu0 0.0
        %651 = vmatprep.subr.mxu0 0.0
        %652 = vmatpush1.msra.mxu0 0.0
        %653 = vmatprep.subr.mxu0 0.0
        %654 = vmatpush1.msra.mxu0 0.0
        %655 = vmatprep.subr.mxu0 0.0
        %656 = vmatpush1.msra.mxu0 0.0
        %657 = vmatprep.subr.mxu0 0.0
        %658 = vmatpush1.msra.mxu0 0.0
        %659 = vmatprep.subr.mxu0 0.0
        %660 = vmatpush1.msra.mxu0 0.0
        %661 = vmatprep.subr.mxu0 0.0
        %662 = vmatpush1.msra.mxu0 0.0
        %663 = vmatprep.subr.mxu0 0.0
        %664 = vmatpush1.msra.mxu0 0.0
        %665 = vmatprep.subr.mxu0 0.0
        %666 = vmatpush1.msra.mxu0 0.0
        %667 = vmatprep.subr.mxu0 0.0
        %668 = vmatpush1.msra.mxu0 0.0
        %669 = vmatprep.subr.mxu0 0.0
        %670 = vmatpush1.msra.mxu0 0.0
        %671 = vmatprep.subr.mxu0 0.0
        %672 = vmatpush1.msra.mxu0 0.0
        %673 = vmatprep.subr.mxu0 0.0
        %674 = vmatpush1.msra.mxu0 0.0
        %675 = vmatprep.subr.mxu0 0.0
        %676 = vmatpush1.msra.mxu0 0.0
        %677 = vmatprep.subr.mxu0 0.0
        %678 = vmatpush1.msra.mxu0 0.0
        %679 = vmatprep.subr.mxu0 0.0
        %680 = vmatpush1.msra.mxu0 0.0
        %681 = vmatprep.subr.mxu0 0.0
        %682 = vmatpush1.msra.mxu0 0.0
        %683 = vmatprep.subr.mxu0 0.0
        %684 = vmatpush1.msra.mxu0 0.0
        %685 = vmatprep.subr.mxu0 0.0
        %686 = vmatpush1.msra.mxu0 0.0
        %687 = vmatprep.subr.mxu0 0.0
        %688 = vmatpush1.msra.mxu0 0.0
        %689 = vmatprep.subr.mxu0 0.0
        %690 = vmatpush1.msra.mxu0 0.0
        %691 = vmatprep.subr.mxu0 0.0
        %692 = vmatpush1.msra.mxu0 0.0
        %693 = vmatprep.subr.mxu0 0.0
        %694 = vmatpush1.msra.mxu0 0.0
        %695 = vmatprep.subr.mxu0 0.0
        %696 = vmatpush1.msra.mxu0 0.0
        %697 = vmatprep.subr.mxu0 0.0
        %698 = vmatpush1.msra.mxu0 0.0
        %699 = vmatprep.subr.mxu0 0.0
        %700 = vmatpush1.msra.mxu0 0.0
        %701 = vmatprep.subr.mxu0 0.0
        %702 = vmatpush1.msra.mxu0 0.0
        %703 = vmatprep.mubr.f32.mxu0 0.0
        %704 = vmatmul.mubr.f32.gmra.mrb[0].mxu0 %v634
        %v705 = vpop.f32.mrb[0].mxu0
        %v706 = vadd.f32 0.0, %v705
        %v707 = vpop.f32.mrb[0].mxu0
        %708 = vmatprep.mubr.f32.mxu0 0.0
        %709 = vmatmul.mubr.f32.gmra.mrb[0].mxu0 %v637
        %v710 = vpop.f32.mrb[0].mxu0
        %v711 = vadd.f32 0.0, %v710
        %v712 = vpop.f32.mrb[0].mxu0
        %713 = vdwg.mxu0
        %v714 = vmax.f32 %v706, 0.0
        %v715 = vmax.f32 %v711, 0.0
        %v716 = vld [vmem:[%s5] sm:$0xff]
        %v717 = vld [vmem:[%s5 + $0x8] sm:$0xff]
        %v718 = vld [vmem:[%s5 + $0x10] sm:$0xff]
        %v719 = vld [vmem:[%s5 + $0x18] sm:$0xff]
        %v720 = vld [vmem:[%s5 + $0x20] sm:$0xff]
        %v721 = vld [vmem:[%s5 + $0x28] sm:$0xff]
        %v722 = vld [vmem:[%s5 + $0x30] sm:$0xff]
        %v723 = vld [vmem:[%s5 + $0x38] sm:$0xff]
        %v725 = vsel %vm454, %v714, 0
        %v728 = vsel %vm454, %v715, 0
        %730 = vmatprep.subr.mxu0 0.0
        %731 = vmatpush1.msra.mxu0 %v716
        %732 = vmatprep.subr.mxu0 0.0
        %733 = vmatpush1.msra.mxu0 %v717
        %734 = vmatprep.subr.mxu0 0.0
        %735 = vmatpush1.msra.mxu0 %v718
        %736 = vmatprep.subr.mxu0 0.0
        %737 = vmatpush1.msra.mxu0 %v719
        %738 = vmatprep.subr.mxu0 0.0
        %739 = vmatpush1.msra.mxu0 %v720
        %740 = vmatprep.subr.mxu0 0.0
        %741 = vmatpush1.msra.mxu0 %v721
        %742 = vmatprep.subr.mxu0 0.0
        %743 = vmatpush1.msra.mxu0 %v722
        %744 = vmatprep.subr.mxu0 0.0
        %745 = vmatpush1.msra.mxu0 %v723
        %746 = vmatprep.subr.mxu0 0.0
        %747 = vmatpush1.msra.mxu0 0.0
        %748 = vmatprep.subr.mxu0 0.0
        %749 = vmatpush1.msra.mxu0 0.0
        %750 = vmatprep.subr.mxu0 0.0
        %751 = vmatpush1.msra.mxu0 0.0
        %752 = vmatprep.subr.mxu0 0.0
        %753 = vmatpush1.msra.mxu0 0.0
        %754 = vmatprep.subr.mxu0 0.0
        %755 = vmatpush1.msra.mxu0 0.0
        %756 = vmatprep.subr.mxu0 0.0
        %757 = vmatpush1.msra.mxu0 0.0
        %758 = vmatprep.subr.mxu0 0.0
        %759 = vmatpush1.msra.mxu0 0.0
        %760 = vmatprep.subr.mxu0 0.0
        %761 = vmatpush1.msra.mxu0 0.0
        %762 = vmatprep.subr.mxu0 0.0
        %763 = vmatpush1.msra.mxu0 0.0
        %764 = vmatprep.subr.mxu0 0.0
        %765 = vmatpush1.msra.mxu0 0.0
        %766 = vmatprep.subr.mxu0 0.0
        %767 = vmatpush1.msra.mxu0 0.0
        %768 = vmatprep.subr.mxu0 0.0
        %769 = vmatpush1.msra.mxu0 0.0
        %770 = vmatprep.subr.mxu0 0.0
        %771 = vmatpush1.msra.mxu0 0.0
        %772 = vmatprep.subr.mxu0 0.0
        %773 = vmatpush1.msra.mxu0 0.0
        %774 = vmatprep.subr.mxu0 0.0
        %775 = vmatpush1.msra.mxu0 0.0
        %776 = vmatprep.subr.mxu0 0.0
        %777 = vmatpush1.msra.mxu0 0.0
        %778 = vmatprep.subr.mxu0 0.0
        %779 = vmatpush1.msra.mxu0 0.0
        %780 = vmatprep.subr.mxu0 0.0
        %781 = vmatpush1.msra.mxu0 0.0
        %782 = vmatprep.subr.mxu0 0.0
        %783 = vmatpush1.msra.mxu0 0.0
        %784 = vmatprep.subr.mxu0 0.0
        %785 = vmatpush1.msra.mxu0 0.0
        %786 = vmatprep.subr.mxu0 0.0
        %787 = vmatpush1.msra.mxu0 0.0
        %788 = vmatprep.subr.mxu0 0.0
        %789 = vmatpush1.msra.mxu0 0.0
        %790 = vmatprep.subr.mxu0 0.0
        %791 = vmatpush1.msra.mxu0 0.0
        %792 = vmatprep.subr.mxu0 0.0
        %793 = vmatpush1.msra.mxu0 0.0
        %794 = vmatprep.mubr.f32.mxu0 0.0
        %795 = vmatmul.mubr.f32.gmra.mrb[0].mxu0 %v725
        %v796 = vpop.f32.mrb[0].mxu0
        %v797 = vadd.f32 0.0, %v796
        %v798 = vpop.f32.mrb[0].mxu0
        %799 = vmatprep.mubr.f32.mxu0 0.0
        %800 = vmatmul.mubr.f32.gmra.mrb[0].mxu0 %v728
        %v801 = vpop.f32.mrb[0].mxu0
        %v802 = vadd.f32 0.0, %v801
        %v803 = vpop.f32.mrb[0].mxu0
        %804 = vdwg.mxu0
        %v805 = vmax.f32 %v797, 0.0
        %v806 = vmax.f32 %v802, 0.0
        %v807 = vld [vmem:[%s6] sm:$0xff]
        %v808 = vld [vmem:[%s6 + $0x8] sm:$0xff]
        %v809 = vld [vmem:[%s6 + $0x10] sm:$0xff]
        %v810 = vld [vmem:[%s6 + $0x18] sm:$0xff]
        %v811 = vld [vmem:[%s6 + $0x20] sm:$0xff]
        %v812 = vld [vmem:[%s6 + $0x28] sm:$0xff]
        %v813 = vld [vmem:[%s6 + $0x30] sm:$0xff]
        %v814 = vld [vmem:[%s6 + $0x38] sm:$0xff]
        %v816 = vsel %vm454, %v805, 0
        %v819 = vsel %vm454, %v806, 0
        %821 = vmatprep.subr.mxu0 0.0
        %822 = vmatpush1.msra.mxu0 %v807
        %823 = vmatprep.subr.mxu0 0.0
        %824 = vmatpush1.msra.mxu0 %v808
        %825 = vmatprep.subr.mxu0 0.0
        %826 = vmatpush1.msra.mxu0 %v809
        %827 = vmatprep.subr.mxu0 0.0
        %828 = vmatpush1.msra.mxu0 %v810
        %829 = vmatprep.subr.mxu0 0.0
        %830 = vmatpush1.msra.mxu0 %v811
        %831 = vmatprep.subr.mxu0 0.0
        %832 = vmatpush1.msra.mxu0 %v812
        %833 = vmatprep.subr.mxu0 0.0
        %834 = vmatpush1.msra.mxu0 %v813
        %835 = vmatprep.subr.mxu0 0.0
        %836 = vmatpush1.msra.mxu0 %v814
        %837 = vmatprep.subr.mxu0 0.0
        %838 = vmatpush1.msra.mxu0 0.0
        %839 = vmatprep.subr.mxu0 0.0
        %840 = vmatpush1.msra.mxu0 0.0
        %841 = vmatprep.subr.mxu0 0.0
        %842 = vmatpush1.msra.mxu0 0.0
        %843 = vmatprep.subr.mxu0 0.0
        %844 = vmatpush1.msra.mxu0 0.0
        %845 = vmatprep.subr.mxu0 0.0
        %846 = vmatpush1.msra.mxu0 0.0
        %847 = vmatprep.subr.mxu0 0.0
        %848 = vmatpush1.msra.mxu0 0.0
        %849 = vmatprep.subr.mxu0 0.0
        %850 = vmatpush1.msra.mxu0 0.0
        %851 = vmatprep.subr.mxu0 0.0
        %852 = vmatpush1.msra.mxu0 0.0
        %853 = vmatprep.subr.mxu0 0.0
        %854 = vmatpush1.msra.mxu0 0.0
        %855 = vmatprep.subr.mxu0 0.0
        %856 = vmatpush1.msra.mxu0 0.0
        %857 = vmatprep.subr.mxu0 0.0
        %858 = vmatpush1.msra.mxu0 0.0
        %859 = vmatprep.subr.mxu0 0.0
        %860 = vmatpush1.msra.mxu0 0.0
        %861 = vmatprep.subr.mxu0 0.0
        %862 = vmatpush1.msra.mxu0 0.0
        %863 = vmatprep.subr.mxu0 0.0
        %864 = vmatpush1.msra.mxu0 0.0
        %865 = vmatprep.subr.mxu0 0.0
        %866 = vmatpush1.msra.mxu0 0.0
        %867 = vmatprep.subr.mxu0 0.0
        %868 = vmatpush1.msra.mxu0 0.0
        %869 = vmatprep.subr.mxu0 0.0
        %870 = vmatpush1.msra.mxu0 0.0
        %871 = vmatprep.subr.mxu0 0.0
        %872 = vmatpush1.msra.mxu0 0.0
        %873 = vmatprep.subr.mxu0 0.0
        %874 = vmatpush1.msra.mxu0 0.0
        %875 = vmatprep.subr.mxu0 0.0
        %876 = vmatpush1.msra.mxu0 0.0
        %877 = vmatprep.subr.mxu0 0.0
        %878 = vmatpush1.msra.mxu0 0.0
        %879 = vmatprep.subr.mxu0 0.0
        %880 = vmatpush1.msra.mxu0 0.0
        %881 = vmatprep.subr.mxu0 0.0
        %882 = vmatpush1.msra.mxu0 0.0
        %883 = vmatprep.subr.mxu0 0.0
        %884 = vmatpush1.msra.mxu0 0.0
        %885 = vmatprep.mubr.f32.mxu0 0.0
        %886 = vmatmul.mubr.f32.gmra.mrb[0].mxu0 %v816
        %v887 = vpop.f32.mrb[0].mxu0
        %v888 = vadd.f32 0.0, %v887
        %v889 = vpop.f32.mrb[0].mxu0
        %890 = vmatprep.mubr.f32.mxu0 0.0
        %891 = vmatmul.mubr.f32.gmra.mrb[0].mxu0 %v819
        %v892 = vpop.f32.mrb[0].mxu0
        %v893 = vadd.f32 0.0, %v892
        %v894 = vpop.f32.mrb[0].mxu0
        %895 = vdwg.mxu0
        %v896 = vadd.f32 %v619, %v888
        %v897 = vadd.f32 %v624, %v893
        %v898 = vsel %vm362, %v896, 0.0
        %899 = vadd.xlane.f32.xlu0 %v898
        %v900 = vpop.xlane.xlu0 %899
        %v901 = vsel %vm362, %v897, 0.0
        %902 = vadd.xlane.f32.xlu0 %v901
        %v903 = vpop.xlane.xlu0 %902
        %v904 = vmul.f32 %v900, 0.03125
        %v905 = vmul.f32 %v903, 0.03125
        %v906 = vsub.f32 %v896, %v904
        %v907 = vsub.f32 %v897, %v905
        %v908 = vmul.f32 %v906, %v906
        %v909 = vmul.f32 %v907, %v907
        %v910 = vsel %vm362, %v908, 0.0
        %911 = vadd.xlane.f32.xlu0 %v910
        %v912 = vpop.xlane.xlu0 %911
        %v913 = vsel %vm362, %v909, 0.0
        %914 = vadd.xlane.f32.xlu0 %v913
        %v915 = vpop.xlane.xlu0 %914
        %v916 = vmul.f32 %v912, 0.03125
        %v917 = vmul.f32 %v915, 0.03125
        %v918 = vadd.f32 %v916, 1e-06
        %v919 = vadd.f32 %v917, 1e-06
        %v920 = vrsqrt.pop %v918
        %v921 = vrsqrt.pop %v919
        %v922 = vmul.f32 %v906, %v920
        %v923 = vmul.f32 %v907, %v921
        %v924 = vld [vmem:[%s7] sm:$0x1]
        %v926 = vlaneseq
        %v927 = vshrl.u32 %v926, 7
        %v928 = vsub.s32 0, %v927
        %v929 = vrot.slane %v924, %v928
        %v931 = vmul.f32 %v922, %v929
        %v932 = vmul.f32 %v923, %v929
        %v933 = vld [vmem:[%s8] sm:$0x1]
        %v935 = vlaneseq
        %v936 = vshrl.u32 %v935, 7
        %v937 = vsub.s32 0, %v936
        %v938 = vrot.slane %v933, %v937
        %v940 = vadd.f32 %v931, %v938
        %v941 = vadd.f32 %v932, %v938
        %942 = vst.msk [vmem:[%s334] sm:$0xff] %vm362, %v940
        %943 = vst.msk [vmem:[%s334 + $0x8] sm:$0xff] %vm362, %v941
        %s944 = sand.u32 %s222, 1
        %s945 = sand.u32 %s222, 1
        %s946 = smul.addr %s945, 16
        %s947 = scalar_lea.vmem [#allocation2], %s946
        // Predicated region
        $region57: #{encoder_forward.1} parent=55 // pred_check
          %p948 = pneg %p232
        $region58: #{encoder_forward.1} parent=55 // pred_check_branch
          %950 = sbr.rel (%p948) target = $region60
        $region59: #{encoder_forward.1} parent=55 // pred_region
          %s951 = smul.u32 2, %s20
          %s952 = ssub.s32 7, %s951
          %p953 = scmp.lt.s32.totalorder %s952, 2
          %s954 = scalar_select %p953, %s952, 2
          %s955 = smul.u32 128, %s954
          %p956 = scmp.ne.s32.totalorder 0, %s955
          %s957 = smul.addr %s951, 8
          %s958 = scalar_lea.vmem %s9, %s957
          // Predicated region
          $region61: #{encoder_forward.1} parent=59 // pred_check
            %p959 = pneg %p956
          $region62: #{encoder_forward.1} parent=59 // pred_check_branch
            %961 = sbr.rel (%p959) target = $region64
          $region63: #{encoder_forward.1} parent=59 // pred_region
            // Predicated region
            $region65: #{encoder_forward.1} parent=63 // pred_check
              _
            $region66: #{encoder_forward.1} parent=63 // pred_check_branch
              %963 = sbr.rel (0) target = $region68
            $region67: #{encoder_forward.1} parent=63 // pred_region
              // Predicated region
              $region87: #{encoder_forward.1} parent=67 // pred_check
                _
              $region88: #{encoder_forward.1} parent=67 // pred_check_branch
                %1014 = sbr.rel (0) target = $region90
              $region89: #{encoder_forward.1} parent=67 // pred_region
                %s1015 = sshrl.u32 %s954, 1
                // While loop
                $region91: #{encoder_forward.1} parent=89 // loop_pre_header
                  _
                $region92: #{encoder_forward.1} parent=89 // loop_header
                  %s1017 = sphi 0, %s1019
                  %p1018 = scmp.ge.s32.totalorder %s1017, %s1015
                  %s1022 = sphi 0, %s1031
                  %s1023 = sphi %s947, %s1034
                  %s1024 = sphi %s958, %s1035
                $region93: #{encoder_forward.1} parent=89 // loop_header_branch
                  %1021 = sbr.rel (%p1018) target = $region97
                $region94: #{encoder_forward.1} parent=89 // loop_body
                  %v1025 = vld [vmem:[%s1023] sm:$0xff]
                  %1026 = vst [vmem:[%s1024] sm:$0xff] %v1025
                  %v1027 = vld [vmem:[%s1023 + $0x8] sm:$0xff]
                  %1028 = vst [vmem:[%s1024 + $0x8] sm:$0xff] %v1027
                  %s1029 = sadd.s32 1, %s1022
                  %p1030 = scmp.ge.s32.totalorder %s1029, %s1015
                  %s1031 = scalar_select %p1030, 0, %s1029
                  %s1032 = smul.u32 %s1031, 16
                  %s1033 = smul.u32 %s1031, 16
                  %s1034 = scalar_lea.vmem %s947, %s1032 [#allocation2]
                  %s1035 = scalar_lea.vmem %s958, %s1033
                $region95: #{encoder_forward.1} parent=89 // loop_footer
                  %s1019 = sadd.s32 %s1017, 1
                $region96: #{encoder_forward.1} parent=89 // loop_footer_branch
                  %1016 = sbr.rel target = $region92
                $region97: #{encoder_forward.1} parent=89 // loop_exit
                  _
                %s1036 = sshrl.u32 %s954, 1
                %s1037 = sand.u32 %s954, 1
                %s1038 = smul.u32 %s1036, 2
                %s1039 = smul.u32 8, %s1038
                %s1040 = scalar_lea.vmem %s947, %s1039 [#allocation2]
                %s1041 = smul.u32 8, %s1038
                %s1042 = scalar_lea.vmem %s958, %s1041
                // While loop
                $region98: #{encoder_forward.1} parent=89 // loop_pre_header
                  _
                $region99: #{encoder_forward.1} parent=89 // loop_header
                  %s1044 = sphi 0, %s1046
                  %p1045 = scmp.ge.s32.totalorder %s1044, %s1037
                  %s1049 = sphi 0, %s1056
                  %s1050 = sphi %s1040, %s1059
                  %s1051 = sphi %s1042, %s1060
                $region100: #{encoder_forward.1} parent=89 // loop_header_branch
                  %1048 = sbr.rel (%p1045) target = $region104
                $region101: #{encoder_forward.1} parent=89 // loop_body
                  %v1052 = vld [vmem:[%s1050] sm:$0xff]
                  %1053 = vst [vmem:[%s1051] sm:$0xff] %v1052
                  %s1054 = sadd.s32 1, %s1049
                  %p1055 = scmp.ge.s32.totalorder %s1054, %s1037
                  %s1056 = scalar_select %p1055, 0, %s1054
                  %s1057 = smul.u32 %s1056, 8
                  %s1058 = smul.u32 %s1056, 8
                  %s1059 = scalar_lea.vmem %s1040, %s1057 [#allocation2]
                  %s1060 = scalar_lea.vmem %s1042, %s1058
                $region102: #{encoder_forward.1} parent=89 // loop_footer
                  %s1046 = sadd.s32 %s1044, 1
                $region103: #{encoder_forward.1} parent=89 // loop_footer_branch
                  %1043 = sbr.rel target = $region99
                $region104: #{encoder_forward.1} parent=89 // loop_exit
                  _
              $region90: #{encoder_forward.1} parent=67 // pred_fallthru
                _
              // Predicated region
              $region105: #{encoder_forward.1} parent=67 // pred_check
                _
              $region106: #{encoder_forward.1} parent=67 // pred_check_branch
                %1062 = sbr.rel target = $region108
              $region107: #{encoder_forward.1} parent=67 // pred_region
                _
              $region108: #{encoder_forward.1} parent=67 // pred_fallthru
                _
            $region68: #{encoder_forward.1} parent=63 // pred_fallthru
              _
            // Predicated region
            $region69: #{encoder_forward.1} parent=63 // pred_check
              _
            $region70: #{encoder_forward.1} parent=63 // pred_check_branch
              %965 = sbr.rel target = $region72
            $region71: #{encoder_forward.1} parent=63 // pred_region
              %s967 = sshrl.u32 %s954, 1
              // While loop
              $region73: #{encoder_forward.1} parent=71 // loop_pre_header
                _
              $region74: #{encoder_forward.1} parent=71 // loop_header
                %s969 = sphi 0, %s971
                %p970 = scmp.ge.s32.totalorder %s969, %s967
                %s974 = sphi 0, %s983
                %s975 = sphi %s947, %s986
                %s976 = sphi %s958, %s987
              $region75: #{encoder_forward.1} parent=71 // loop_header_branch
                %973 = sbr.rel (%p970) target = $region79
              $region76: #{encoder_forward.1} parent=71 // loop_body
                %v977 = vld [vmem:[%s975] sm:$0xff]
                %978 = vst [vmem:[%s976] sm:$0xff] %v977
                %v979 = vld [vmem:[%s975 + $0x8] sm:$0xff]
                %980 = vst [vmem:[%s976 + $0x8] sm:$0xff] %v979
                %s981 = sadd.s32 1, %s974
                %p982 = scmp.ge.s32.totalorder %s981, %s967
                %s983 = scalar_select %p982, 0, %s981
                %s984 = smul.u32 %s983, 16
                %s985 = smul.u32 %s983, 16
                %s986 = scalar_lea.vmem %s947, %s984 [#allocation2]
                %s987 = scalar_lea.vmem %s958, %s985
              $region77: #{encoder_forward.1} parent=71 // loop_footer
                %s971 = sadd.s32 %s969, 1
              $region78: #{encoder_forward.1} parent=71 // loop_footer_branch
                %968 = sbr.rel target = $region74
              $region79: #{encoder_forward.1} parent=71 // loop_exit
                _
              %s988 = sshrl.u32 %s954, 1
              %s989 = sand.u32 %s954, 1
              %s990 = smul.u32 %s988, 2
              %s991 = smul.u32 8, %s990
              %s992 = scalar_lea.vmem %s947, %s991 [#allocation2]
              %s993 = smul.u32 8, %s990
              %s994 = scalar_lea.vmem %s958, %s993
              // While loop
              $region80: #{encoder_forward.1} parent=71 // loop_pre_header
                _
              $region81: #{encoder_forward.1} parent=71 // loop_header
                %s996 = sphi 0, %s998
                %p997 = scmp.ge.s32.totalorder %s996, %s989
                %s1001 = sphi 0, %s1008
                %s1002 = sphi %s992, %s1011
                %s1003 = sphi %s994, %s1012
              $region82: #{encoder_forward.1} parent=71 // loop_header_branch
                %1000 = sbr.rel (%p997) target = $region86
              $region83: #{encoder_forward.1} parent=71 // loop_body
                %v1004 = vld [vmem:[%s1002] sm:$0xff]
                %1005 = vst [vmem:[%s1003] sm:$0xff] %v1004
                %s1006 = sadd.s32 1, %s1001
                %p1007 = scmp.ge.s32.totalorder %s1006, %s989
                %s1008 = scalar_select %p1007, 0, %s1006
                %s1009 = smul.u32 %s1008, 8
                %s1010 = smul.u32 %s1008, 8
                %s1011 = scalar_lea.vmem %s992, %s1009 [#allocation2]
                %s1012 = scalar_lea.vmem %s994, %s1010
              $region84: #{encoder_forward.1} parent=71 // loop_footer
                %s998 = sadd.s32 %s996, 1
              $region85: #{encoder_forward.1} parent=71 // loop_footer_branch
                %995 = sbr.rel target = $region81
              $region86: #{encoder_forward.1} parent=71 // loop_exit
                _
            $region72: #{encoder_forward.1} parent=63 // pred_fallthru
              _
          $region64: #{encoder_forward.1} parent=59 // pred_fallthru
            _
          %1063 = vnop
        $region60: #{encoder_forward.1} parent=55 // pred_fallthru
          _
      $region56: #{encoder_forward.1} parent=5 // pred_fallthru
        _
      %p1064 = scmp.le.s32.totalorder 2, %s15
      // Predicated region
      $region109: #{encoder_forward.1} parent=5 // pred_check
        %p1065 = pneg %p1064
      $region110: #{encoder_forward.1} parent=5 // pred_check_branch
        %1067 = sbr.rel (%p1065) target = $region112
      $region111: #{encoder_forward.1} parent=5 // pred_region
        %s1068 = ssub.s32 %s15, 2
        // Predicated region
        $region113: #{encoder_forward.1} parent=111 // pred_check
          %p1069 = pneg %p238
        $region114: #{encoder_forward.1} parent=111 // pred_check_branch
          %1071 = sbr.rel (%p1069) target = $region116
        $region115: #{encoder_forward.1} parent=111 // pred_region
          %s1072 = sand.u32 %s223, 1
          %s1073 = sand.u32 %s223, 1
          %s1074 = smul.addr %s1073, 16
          %s1075 = scalar_lea.vmem [#allocation2], %s1074
        $region116: #{encoder_forward.1} parent=111 // pred_fallthru
          _
      $region112: #{encoder_forward.1} parent=5 // pred_fallthru
        _
    $region6: #{encoder_forward.1} parent=1 // loop_footer
      %s19 = sadd.s32 1, %s15
    $region7: #{encoder_forward.1} parent=1 // loop_footer_branch
      %14 = sbr.rel target = $region3
    $region8: #{encoder_forward.1} parent=1 // loop_exit
      _

</llo_original>
